<compile_context>
chip_gen: v7x
topology: tpu7x:2x2x1
jax: 0.10.0
libtpu: 0.0.40
codegen_flags: <defaults>
</compile_context>

<pallas_src>
import functools

import jax
import jax.numpy as jnp
import numpy as np
from jax.experimental import pallas as pl
from jax.experimental.pallas import tpu as pltpu

LANE = 128
_VMEM_TILE_BUDGET = 20 * 1024 * 1024  # budget for the tile-dependent working set


# ---------------------------------------------------------------------------
# Pallas kernel: one grid step == one lane tile.
#   Path A (2-D refs): x_ref (L, T),    o_ref (P, T)         (lane-folded B*C)
#   Path B (3-D refs): x_ref (1, L, T), o_ref (1, P, T)      (direct, per batch)
# ---------------------------------------------------------------------------
def dlinear_kernel(x_ref, w_ref, bias_ref, o_ref):
    x = x_ref[0] if len(x_ref.shape) == 3 else x_ref[...]
    out = jnp.dot(w_ref[...], x, preferred_element_type=jnp.float32)
    out = (out + bias_ref[...]).astype(o_ref.dtype)
    if len(o_ref.shape) == 3:
        o_ref[0] = out
    else:
        o_ref[...] = out


# ---------------------------------------------------------------------------
# Constant prep (cached): dense moving-average matrix A for replicate-padded
# AvgPool1d(kernel_size, stride=1).  Used only at weight-fold time.
# ---------------------------------------------------------------------------
@functools.lru_cache(maxsize=None)
def _moving_avg_matrix(seq_len: int, kernel_size: int) -> np.ndarray:
    pad = (kernel_size - 1) // 2
    t = np.arange(seq_len)[:, None]                                      # (L, 1)
    j = np.clip(t + np.arange(-pad, pad + 1)[None, :], 0, seq_len - 1)   # (L, K)
    A = np.zeros((seq_len, seq_len), dtype=np.float32)
    np.add.at(A, (np.repeat(t, kernel_size, axis=1), j), 1.0 / kernel_size)
    return A


def fold_dlinear_params(ws, bs, wt, bt, kernel_size=25):
    """Fold decomposition + the two linear heads into one (P, L) weight + bias.

    Hoist/cache this in serving code (weights are static across calls)."""
    P, L = ws.shape
    A = jnp.asarray(_moving_avg_matrix(L, kernel_size))
    w = (ws + jnp.dot(wt - ws, A, preferred_element_type=jnp.float32)
         ).astype(jnp.float32)                                           # (P, L)
    bias = (bs + bt).reshape(P, 1).astype(jnp.float32)                   # (P, 1)
    return w, bias


# ---------------------------------------------------------------------------
# Tiling policy
# ---------------------------------------------------------------------------
def _lane_tiling(n, target_lanes, L, P, min_steps=1):
    """Return (lane_tile, padded_extent, steps).

    lane_tile is a multiple of 128, close to `target_lanes`, capped so the
    double-buffered working set fits _VMEM_TILE_BUDGET; the padded extent is
    a multiple of lane_tile with minimal over-padding."""
    m = -(-n // LANE)                               # 128-lane groups needed
    per_lane = (2 * (L + P) + P) * 4                # dbl-buffered x/out + f32 temp
    max_tile = max(LANE, (_VMEM_TILE_BUDGET // per_lane) // LANE * LANE)
    target = max(LANE, min((target_lanes // LANE) * LANE, max_tile))
    steps = max(min_steps, -(-(m * LANE) // target))
    groups_per_step = -(-m // steps)
    tile = groups_per_step * LANE
    steps = -(-m // groups_per_step)
    return tile, tile * steps, steps


def _compiler_params(L, P, lane_tile, dims):
    # double-buffered x/out tiles + f32 matmul temp + double-buffered weight/bias
    need = (2 * (L + P) + P) * lane_tile * 4 + 2 * P * (L + 1) * 4
    limit = int(min(46 * 1024 * 1024, max(2 * need, 32 * 1024 * 1024)))
    return pltpu.CompilerParams(dimension_semantics=dims,
                                vmem_limit_bytes=limit)


# ---------------------------------------------------------------------------
# Wrapper
# ---------------------------------------------------------------------------
def dlinear_apply(x, w, bias, *, block_lanes=2048):
    """x: (B, L, C) f32; w: (P, L) folded weight; bias: (P, 1).  Returns (B, P, C)."""
    B, L, C = x.shape
    P = w.shape[0]

    cost = pl.CostEstimate(flops=2 * P * L * B * C,
                           transcendentals=0,
                           bytes_accessed=4 * (B * C * (L + P) + P * L))

    if C % LANE == 0 or C >= LANE:
        # ---- Path B: direct (B, L, C) layout, no HBM transposes. ------------
        tc, Cp, c_steps = _lane_tiling(C, block_lanes, L, P,
                                       min_steps=1 if B > 1 else 2)
        xp = x if Cp == C else jnp.pad(x, ((0, 0), (0, 0), (0, Cp - C)))
        out = pl.pallas_call(
            dlinear_kernel,
            out_shape=jax.ShapeDtypeStruct((B, P, Cp), x.dtype),
            grid_spec=pltpu.PrefetchScalarGridSpec(
                num_scalar_prefetch=0,
                grid=(B, c_steps),
                in_specs=[
                    pl.BlockSpec((1, L, tc), lambda b, c: (b, 0, c)),   # x tile
                    pl.BlockSpec((P, L), lambda b, c: (0, 0)),          # weight
                    pl.BlockSpec((P, 1), lambda b, c: (0, 0)),          # bias
                ],
                out_specs=pl.BlockSpec((1, P, tc), lambda b, c: (b, 0, c)),
            ),
            compiler_params=_compiler_params(L, P, tc, ("parallel", "parallel")),
            cost_estimate=cost,
        )(xp, w, bias)
        return out[:, :, :C] if Cp != C else out

    # ---- Path A: small C -> fold batch into the lane axis (L, B*C). ---------
    # TODO(synk): for tiny C the two wrapper transposes dominate HBM traffic.
    N = B * C
    tn, Np, n_steps = _lane_tiling(N, block_lanes, L, P, min_steps=2)
    x2d = jnp.transpose(x, (1, 0, 2)).reshape(L, N)
    if Np != N:
        x2d = jnp.pad(x2d, ((0, 0), (0, Np - N)))
    out2d = pl.pallas_call(
        dlinear_kernel,
        out_shape=jax.ShapeDtypeStruct((P, Np), x.dtype),
        grid_spec=pltpu.PrefetchScalarGridSpec(
            num_scalar_prefetch=0,
            grid=(n_steps,),
            in_specs=[
                pl.BlockSpec((L, tn), lambda n: (0, n)),    # x tile
                pl.BlockSpec((P, L), lambda n: (0, 0)),     # weight
                pl.BlockSpec((P, 1), lambda n: (0, 0)),     # bias
            ],
            out_specs=pl.BlockSpec((P, tn), lambda n: (0, n)),
        ),
        compiler_params=_compiler_params(L, P, tn, ("parallel",)),
        cost_estimate=cost,
    )(x2d, w, bias)
    out2d = out2d[:, :N]
    return jnp.transpose(out2d.reshape(P, B, C), (1, 0, 2))


def dlinear_forward(x, ws, bs, wt, bt, kernel_size=25, block_lanes=2048):
    """Matches Dlinear.forward: x (B, L, C) -> (B, P, C)."""
    w, bias = fold_dlinear_params(ws, bs, wt, bt, kernel_size)
    return dlinear_apply(x, w, bias, block_lanes=block_lanes)


# ---------------------------------------------------------------------------
# Pure-JAX reference (mirrors the PyTorch forward) for a correctness check.
# ---------------------------------------------------------------------------
def dlinear_reference(x, ws, bs, wt, bt, kernel_size=25):
    B, L, C = x.shape
    pad = (kernel_size - 1) // 2
    front = jnp.repeat(x[:, 0:1, :], pad, axis=1)
    end = jnp.repeat(x[:, -1:, :], pad, axis=1)
    xp = jnp.concatenate([front, x, end], axis=1)                       # (B, L+2p, C)
    idx = jnp.arange(L)[:, None] + jnp.arange(kernel_size)[None, :]     # (L, K)
    windows = xp[:, idx, :]                                             # (B, L, K, C)
    trend = windows.mean(axis=2)                                        # (B, L, C)
    seasonal = x - trend
    sea_out = jnp.einsum("blc,pl->bpc", seasonal, ws) + bs[None, :, None]
    tre_out = jnp.einsum("blc,pl->bpc", trend, wt) + bt[None, :, None]
    return sea_out + tre_out


if __name__ == "__main__":
    kernel_size = 25
    key = jax.random.PRNGKey(0)

    def make_params(k, L, P):
        kws, kbs, kwt, kbt = jax.random.split(k, 4)
        bound = 1.0 / np.sqrt(L)
        ws = jax.random.uniform(kws, (P, L), jnp.float32, -bound, bound)
        bs = jax.random.uniform(kbs, (P,), jnp.float32, -bound, bound)
        wt = jax.random.uniform(kwt, (P, L), jnp.float32, -bound, bound)
        bt = jax.random.uniform(kbt, (P,), jnp.float32, -bound, bound)
        return ws, bs, wt, bt

    # Case 1: small channel count -> lane-folded path (Path A).
    B, L, C, P = 2, 48, 16, 24
    k1, k2, key = jax.random.split(key, 3)
    x = jax.random.normal(k1, (B, L, C), dtype=jnp.float32)
    ws, bs, wt, bt = make_params(k2, L, P)
    out = jax.block_until_ready(dlinear_forward(x, ws, bs, wt, bt, kernel_size))
    ref = dlinear_reference(x, ws, bs, wt, bt, kernel_size)
    np.testing.assert_allclose(np.asarray(out), np.asarray(ref),
                               rtol=1e-4, atol=1e-4)

    # Case 2: 128 channels -> direct (no-transpose) path (Path B).
    B, L, C, P = 2, 48, 128, 24
    k1, k2, key = jax.random.split(key, 3)
    x = jax.random.normal(k1, (B, L, C), dtype=jnp.float32)
    ws, bs, wt, bt = make_params(k2, L, P)
    out = jax.block_until_ready(dlinear_forward(x, ws, bs, wt, bt, kernel_size))
    ref = dlinear_reference(x, ws, bs, wt, bt, kernel_size)
    np.testing.assert_allclose(np.asarray(out), np.asarray(ref),
                               rtol=1e-4, atol=1e-4)

    print("KERNEL_OK")
</pallas_src>

<mosaic_0001>
module attributes {stable_mosaic.version = 11 : i64} {
  func.func @dlinear_kernel(%arg0: i32, %arg1: memref<48x128xf32, #tpu.memory_space<vmem>>, %arg2: memref<24x48xf32, #tpu.memory_space<vmem>>, %arg3: memref<24x1xf32, #tpu.memory_space<vmem>>, %arg4: memref<24x128xf32, #tpu.memory_space<vmem>>) attributes {dimension_semantics = [#tpu.dimension_semantics<parallel>], iteration_bounds = array<i64: 1>, scalar_prefetch = 0 : i64, scratch_operands = 0 : i64, tpu.core_type = #tpu.core_type<tc>, window_params = [{transform_indices = @transform_0, window_bounds = array<i64: 48, 128>}, {pipeline_mode = #tpu.pipeline_mode<synchronous>, transform_indices = @transform_1, window_bounds = array<i64: 24, 48>}, {pipeline_mode = #tpu.pipeline_mode<synchronous>, transform_indices = @transform_2, window_bounds = array<i64: 24, 1>}, {transform_indices = @transform_3, window_bounds = array<i64: 24, 128>}]} {
    %c0 = arith.constant 0 : index
    %c0_0 = arith.constant 0 : index
    %0 = vector.load %arg1[%c0, %c0_0] : memref<48x128xf32, #tpu.memory_space<vmem>>, vector<48x128xf32>
    %c0_1 = arith.constant 0 : index
    %c0_2 = arith.constant 0 : index
    %1 = vector.load %arg2[%c0_1, %c0_2] : memref<24x48xf32, #tpu.memory_space<vmem>>, vector<24x48xf32>
    %cst = arith.constant dense<0.000000e+00> : vector<24x128xf32>
    %2 = tpu.matmul %1, %0, %cst {dimension_numbers = #tpu.dot_dimension_numbers<[1], [0], [0], [1], [0, 0, 1, 1], [], []>} : vector<24x48xf32>, vector<48x128xf32>, vector<24x128xf32> -> vector<24x128xf32>
    %c0_3 = arith.constant 0 : index
    %c0_4 = arith.constant 0 : index
    %3 = vector.load %arg3[%c0_3, %c0_4] : memref<24x1xf32, #tpu.memory_space<vmem>>, vector<24x1xf32>
    %4 = vector.broadcast %3 : vector<24x1xf32> to vector<24x128xf32>
    %5 = arith.addf %2, %4 : vector<24x128xf32>
    %c0_5 = arith.constant 0 : index
    %c0_6 = arith.constant 0 : index
    %6 = vector.load %arg4[%c0_5, %c0_6] : memref<24x128xf32, #tpu.memory_space<vmem>>, vector<24x128xf32>
    tpu.vector_store %arg4[%c0_5, %c0_6], %5 {strides = array<i32>} : memref<24x128xf32, #tpu.memory_space<vmem>>, vector<24x128xf32>,
    return
  }
  func.func @transform_0(%arg0: i32) -> (i32, i32) {
    %c0_i32 = arith.constant 0 : i32
    %c0_i32_0 = arith.constant 0 : i32
    return %c0_i32, %arg0 : i32, i32
  }
  func.func @transform_1(%arg0: i32) -> (i32, i32) {
    %c0_i32 = arith.constant 0 : i32
    %c0_i32_0 = arith.constant 0 : i32
    %c0_i32_1 = arith.constant 0 : i32
    return %c0_i32, %c0_i32_0 : i32, i32
  }
  func.func @transform_2(%arg0: i32) -> (i32, i32) {
    %c0_i32 = arith.constant 0 : i32
    %c0_i32_0 = arith.constant 0 : i32
    %c0_i32_1 = arith.constant 0 : i32
    return %c0_i32, %c0_i32_0 : i32, i32
  }
  func.func @transform_3(%arg0: i32) -> (i32, i32) {
    %c0_i32 = arith.constant 0 : i32
    %c0_i32_0 = arith.constant 0 : i32
    return %c0_i32, %arg0 : i32, i32
  }
}

</mosaic_0001>

<llo_original>
// kernel: tpu_custom_call.1
$region0: #{tpu_custom_call.1}
  #allocation0 [shape = 'u32[]', space=smem, size = 0x4, offset = 0x4, fixed_abs, tag = 'smem constant byte address 0x4 - core index']
  #allocation1 [shape = 'u32[144,128]{1,0:T(1,128)}', space=vmem, size = 0x12000, scoped, tag = 'internal scratch']
  %s0 = inlined_call_operand.hbm [shape: f32[48,128], index: 0, kind: input, shape index: {}]
  %s1 = inlined_call_operand.vmem [shape: f32[24,48], index: 1, kind: input, shape index: {}]
  %s2 = inlined_call_operand.vmem [shape: f32[24,1], index: 2, kind: input, shape index: {}]
  %s3 = inlined_call_operand.hbm [shape: f32[24,128], index: 3, kind: output, shape index: {}]
  %s4 = sld [smem:[#allocation0]]
  $region26: #{tpu_custom_call.1} parent=0
    _
  %s6 = ssub.s32 1, %s4
  %s7 = scalar_select 0, %s6, %s4
  $region1: #{tpu_custom_call.1} parent=0
    #allocation2 [shape = 'u8[24576]{0}', space=vmem, size = 0x6000, scoped, tag = 'input window, operand 0, single buffered']
    #allocation3 [shape = 's32[1]{0}', space=sflag, size = 0x4, scoped, tag = 'scoped memory for tpu_custom_call.1']
    #allocation4 [shape = 's32[1]{0}', space=sflag, size = 0x4, scoped, tag = 'scoped memory for tpu_custom_call.1']
    #allocation5 [shape = 'u8[12288]{0}', space=vmem, size = 0x3000, scoped, tag = 'output window, operand 0, single buffered']
    %8 = vsyncpa [#allocation3], 0
    %9 = vsyncpa [#allocation4], 0
    // Predicated region
    $region2: #{tpu_custom_call.1} parent=1 // pred_check
      _
    $region3: #{tpu_custom_call.1} parent=1 // pred_check_branch
      %11 = sbr.rel (0) target = $region5
    $region4: #{tpu_custom_call.1} parent=1 // pred_region
      %s13 = ssub.s32 768, 768
      %14 = vsyncadd [#allocation3], %s13
      %s15 = sshll.u32 [#allocation2], 4
      %s16 = int_to_ptr.vmem [resolvable:$true] %s15
      %21 = dma.hbm_to_vmem [thread:$0]  %s0, 768, %s16, [#allocation3], 128, 128, 8
    $region5: #{tpu_custom_call.1} parent=1 // pred_fallthru
      _
    // Predicated region
    $region6: #{tpu_custom_call.1} parent=1 // pred_check
      _
    $region7: #{tpu_custom_call.1} parent=1 // pred_check_branch
      %23 = sbr.rel (0) target = $region9
    $region8: #{tpu_custom_call.1} parent=1 // pred_region
      _
    $region9: #{tpu_custom_call.1} parent=1 // pred_fallthru
      _
    // Predicated region
    $region10: #{tpu_custom_call.1} parent=1 // pred_check
      _
    $region11: #{tpu_custom_call.1} parent=1 // pred_check_branch
      %25 = sbr.rel (0) target = $region13
    $region12: #{tpu_custom_call.1} parent=1 // pred_region
      _
    $region13: #{tpu_custom_call.1} parent=1 // pred_fallthru
      _
    // Predicated region
    $region14: #{tpu_custom_call.1} parent=1 // pred_check
      _
    $region15: #{tpu_custom_call.1} parent=1 // pred_check_branch
      %27 = sbr.rel (0) target = $region17
    $region16: #{tpu_custom_call.1} parent=1 // pred_region
      %28 = dma.done [#allocation3], 768
    $region17: #{tpu_custom_call.1} parent=1 // pred_fallthru
      _
    %v29 = vld [vmem:[#allocation2] sm:$0xff]
    %v30 = vld [vmem:[#allocation2 + $0x8] sm:$0xff]
    %v31 = vld [vmem:[#allocation2 + $0x10] sm:$0xff]
    %v32 = vld [vmem:[#allocation2 + $0x18] sm:$0xff]
    %v33 = vld [vmem:[#allocation2 + $0x20] sm:$0xff]
    %v34 = vld [vmem:[#allocation2 + $0x28] sm:$0xff]
    %v35 = vld [vmem:[%s1] sm:$0xff]
    %v36 = vld [vmem:[%s1 + $0x8] sm:$0xff]
    %v37 = vld [vmem:[%s1 + $0x10] sm:$0xff]
    %v38 = vld [vmem:[%s2] sm:$0xff]
    %v39 = vld [vmem:[%s2 + $0x8] sm:$0xff]
    %v40 = vld [vmem:[%s2 + $0x10] sm:$0xff]
    %42 = vset.pattern.permute.xlu0 0
    %43 = vperm.xlu0 %42, %v38
    %v44 = vpop.permute.xlu0 %43
    %47 = vset.pattern.permute.xlu0 0
    %48 = vperm.xlu0 %47, %v39
    %v49 = vpop.permute.xlu0 %48
    %52 = vset.pattern.permute.xlu0 0
    %53 = vperm.xlu0 %52, %v40
    %v54 = vpop.permute.xlu0 %53
    %vm56 = vcmask 392192
    %v58 = vsel %vm56, %v35, 0
    %v61 = vsel %vm56, %v36, 0
    %v64 = vsel %vm56, %v37, 0
    %66 = vmatprep.subr.mxu0 0.0
    %67 = vmatpush1.msra.mxu0 %v29
    %68 = vmatprep.subr.mxu0 0.0
    %69 = vmatpush1.msra.mxu0 %v30
    %70 = vmatprep.subr.mxu0 0.0
    %71 = vmatpush1.msra.mxu0 %v31
    %72 = vmatprep.subr.mxu0 0.0
    %73 = vmatpush1.msra.mxu0 %v32
    %74 = vmatprep.subr.mxu0 0.0
    %75 = vmatpush1.msra.mxu0 %v33
    %76 = vmatprep.subr.mxu0 0.0
    %77 = vmatpush1.msra.mxu0 %v34
    %78 = vmatprep.subr.mxu0 0.0
    %79 = vmatpush1.msra.mxu0 0.0
    %80 = vmatprep.subr.mxu0 0.0
    %81 = vmatpush1.msra.mxu0 0.0
    %82 = vmatprep.subr.mxu0 0.0
    %83 = vmatpush1.msra.mxu0 0.0
    %84 = vmatprep.subr.mxu0 0.0
    %85 = vmatpush1.msra.mxu0 0.0
    %86 = vmatprep.subr.mxu0 0.0
    %87 = vmatpush1.msra.mxu0 0.0
    %88 = vmatprep.subr.mxu0 0.0
    %89 = vmatpush1.msra.mxu0 0.0
    %90 = vmatprep.subr.mxu0 0.0
    %91 = vmatpush1.msra.mxu0 0.0
    %92 = vmatprep.subr.mxu0 0.0
    %93 = vmatpush1.msra.mxu0 0.0
    %94 = vmatprep.subr.mxu0 0.0
    %95 = vmatpush1.msra.mxu0 0.0
    %96 = vmatprep.subr.mxu0 0.0
    %97 = vmatpush1.msra.mxu0 0.0
    %98 = vmatprep.subr.mxu0 0.0
    %99 = vmatpush1.msra.mxu0 0.0
    %100 = vmatprep.subr.mxu0 0.0
    %101 = vmatpush1.msra.mxu0 0.0
    %102 = vmatprep.subr.mxu0 0.0
    %103 = vmatpush1.msra.mxu0 0.0
    %104 = vmatprep.subr.mxu0 0.0
    %105 = vmatpush1.msra.mxu0 0.0
    %106 = vmatprep.subr.mxu0 0.0
    %107 = vmatpush1.msra.mxu0 0.0
    %108 = vmatprep.subr.mxu0 0.0
    %109 = vmatpush1.msra.mxu0 0.0
    %110 = vmatprep.subr.mxu0 0.0
    %111 = vmatpush1.msra.mxu0 0.0
    %112 = vmatprep.subr.mxu0 0.0
    %113 = vmatpush1.msra.mxu0 0.0
    %114 = vmatprep.subr.mxu0 0.0
    %115 = vmatpush1.msra.mxu0 0.0
    %116 = vmatprep.subr.mxu0 0.0
    %117 = vmatpush1.msra.mxu0 0.0
    %118 = vmatprep.subr.mxu0 0.0
    %119 = vmatpush1.msra.mxu0 0.0
    %120 = vmatprep.subr.mxu0 0.0
    %121 = vmatpush1.msra.mxu0 0.0
    %122 = vmatprep.subr.mxu0 0.0
    %123 = vmatpush1.msra.mxu0 0.0
    %124 = vmatprep.subr.mxu0 0.0
    %125 = vmatpush1.msra.mxu0 0.0
    %126 = vmatprep.subr.mxu0 0.0
    %127 = vmatpush1.msra.mxu0 0.0
    %128 = vmatprep.subr.mxu0 0.0
    %129 = vmatpush1.msra.mxu0 0.0
    %130 = vmatprep.mubr.f32.mxu0 0.0
    %131 = vmatmul.mubr.f32.gmra.mrb[0].mxu0 %v58
    %v132 = vpop.f32.mrb[0].mxu0
    %v133 = vadd.f32 %v44, %v132
    %v134 = vpop.f32.mrb[0].mxu0
    %135 = vmatprep.mubr.f32.mxu0 0.0
    %136 = vmatmul.mubr.f32.gmra.mrb[0].mxu0 %v61
    %v137 = vpop.f32.mrb[0].mxu0
    %v138 = vadd.f32 %v49, %v137
    %v139 = vpop.f32.mrb[0].mxu0
    %140 = vmatprep.mubr.f32.mxu0 0.0
    %141 = vmatmul.mubr.f32.gmra.mrb[0].mxu0 %v64
    %v142 = vpop.f32.mrb[0].mxu0
    %v143 = vadd.f32 %v54, %v142
    %v144 = vpop.f32.mrb[0].mxu0
    %145 = vdwg.mxu0
    %146 = vst [vmem:[#allocation5] sm:$0xff] %v133
    %147 = vst [vmem:[#allocation5 + $0x8] sm:$0xff] %v138
    %148 = vst [vmem:[#allocation5 + $0x10] sm:$0xff] %v143
    // Predicated region
    $region18: #{tpu_custom_call.1} parent=1 // pred_check
      _
    $region19: #{tpu_custom_call.1} parent=1 // pred_check_branch
      %150 = sbr.rel (0) target = $region21
    $region20: #{tpu_custom_call.1} parent=1 // pred_region
      %s152 = ssub.s32 384, 384
      %153 = vsyncadd [#allocation4], %s152
      %s154 = sshll.u32 [#allocation5], 4
      %s155 = int_to_ptr.vmem [resolvable:$true] %s154
      %160 = dma.vmem_to_hbm [thread:$0]  %s155, 384, %s3, [#allocation4], 128, 128, 8
    $region21: #{tpu_custom_call.1} parent=1 // pred_fallthru
      _
    // Predicated region
    $region22: #{tpu_custom_call.1} parent=1 // pred_check
      _
    $region23: #{tpu_custom_call.1} parent=1 // pred_check_branch
      %162 = sbr.rel (0) target = $region25
    $region24: #{tpu_custom_call.1} parent=1 // pred_region
      %163 = dma.done [#allocation4], 384
    $region25: #{tpu_custom_call.1} parent=1 // pred_fallthru
      _
    %164 = vsyncpa [#allocation3], 1
    %165 = vsyncpa [#allocation4], 1

</llo_original>
